<compile_context>
chip_gen: v7x
topology: tpu7x:2x2x1
jax: 0.10.0
libtpu: 0.0.40
codegen_flags: <defaults>
</compile_context>

<pallas_src>
import functools

import numpy as np
import jax
import jax.numpy as jnp
from jax.experimental import pallas as pl
from jax.experimental.pallas import tpu as pltpu


# ----------------------------- in-kernel math -------------------------------

def _erf(z):
    # Abramowitz & Stegun 7.1.26 rational approximation (|err| < 1.5e-7),
    # matches F.gelu's exact (erf-based) GELU to f32 precision.
    a1, a2, a3 = 0.254829592, -0.284496736, 1.421413741
    a4, a5, p = -1.453152027, 1.061405429, 0.3275911
    s = jnp.where(z >= 0, 1.0, -1.0)
    az = jnp.abs(z)
    t = 1.0 / (1.0 + p * az)
    poly = ((((a5 * t + a4) * t + a3) * t + a2) * t + a1) * t
    return s * (1.0 - poly * jnp.exp(-az * az))


def _gelu(x):
    return 0.5 * x * (1.0 + _erf(x * 0.7071067811865476))


def _ln_rows(x, gamma, beta, eps=1e-5):
    """LayerNorm over axis 0 (channel-first tiles: features on sublanes)."""
    mu = jnp.mean(x, axis=0, keepdims=True)
    var = jnp.mean((x - mu) ** 2, axis=0, keepdims=True)
    return (x - mu) * jax.lax.rsqrt(var + eps) * gamma + beta


def _ln_lanes(x, gamma, beta, eps=1e-5):
    """LayerNorm over the last axis (pure-JAX reference path)."""
    mu = jnp.mean(x, axis=-1, keepdims=True)
    var = jnp.mean((x - mu) ** 2, axis=-1, keepdims=True)
    return (x - mu) * jax.lax.rsqrt(var + eps) * gamma + beta


# ------------------------------ Pallas kernel --------------------------------

def fused_gmlp_kernel(gid_ref, x_ref, wsp_ref, pv_ref, o_ref):
    """One gMLP block over one 128-token block, channel-first & lane-dense.

    x_ref  : (C, T)           tokens on lanes, T = multiple of 128
    wsp_ref: (1, T + 8, T)    rows 0:T = block-diag wsp^T, row T = tiled bsp
    pv_ref : (1, 2F, C+F+4)   cols 0:C = w1^T, cols C:C+F rows 0:C = w2^T,
                              cols C+F: = packed vector params
    """
    del gid_ref  # consumed by the index_maps only
    x = x_ref[...]                               # (C, T)
    c, t = x.shape

    pv = pv_ref[0]                               # (2F, C+F+4)
    f2 = pv.shape[0]
    f = f2 // 2
    w1t = pv[:, 0:c]                             # (2F, C)
    w2t = pv[0:c, c:c + f]                       # (C, F)
    vp = pv[:, c + f:c + f + 4]                  # (2F, 4)
    b1 = vp[:, 0:1]                              # (2F, 1)
    g1, be1 = vp[0:c, 1:2], vp[c:2 * c, 1:2]     # (C, 1)
    g2, be2 = vp[0:f, 2:3], vp[f:f2, 2:3]        # (F, 1)
    b2 = vp[0:c, 3:4]                            # (C, 1)

    wsp_full = wsp_ref[0]                        # (T + 8, T)
    wspbd = wsp_full[0:t, :]                     # (T, T) block-diagonal wsp^T
    bsp = wsp_full[t:t + 1, :]                   # (1, T)

    resid = x

    # channel LayerNorm + channel_proj1 + GELU : one (2F,C)x(C,T) matmul
    xn = _ln_rows(x, g1, be1)
    h = jnp.dot(w1t, xn, preferred_element_type=jnp.float32) + b1
    h = _gelu(h)                                 # (2F, T)

    # u/v split along sublanes (8-aligned -> no relayout)
    u = h[0:f]                                   # (F, T)
    v = h[f:f2]                                  # (F, T)

    # Spatial Gating Unit: LN over F, then token mixing for all windows of this
    # block at once via the block-diagonal wsp^T -> one wide MXU matmul.
    vn = _ln_rows(v, g2, be2)
    v2 = jnp.dot(vn, wspbd, preferred_element_type=jnp.float32) + bsp

    gated = u * v2                               # (F, T)
    # NOTE: the two channel projections (K=C=4, K=F=8) are latency-bound MXU
    # pushes; at larger T they amortize -- keep them on the MXU here.
    out = jnp.dot(w2t, gated, preferred_element_type=jnp.float32) + b2
    o_ref[...] = out + resid                     # lane-dense (C, T) store


def fused_gmlp(x_all, gid, wsp_stack, pv_stack, t_block):
    """Apply the per-group gMLP blocks to all token blocks in one pallas_call."""
    c, tp = x_all.shape
    nblk = tp // t_block
    f2, pvc = pv_stack.shape[1], pv_stack.shape[2]
    return pl.pallas_call(
        fused_gmlp_kernel,
        out_shape=jax.ShapeDtypeStruct((c, tp), x_all.dtype),
        grid_spec=pltpu.PrefetchScalarGridSpec(
            num_scalar_prefetch=1,                 # gid: block -> group id
            grid=(nblk,),
            in_specs=[
                pl.BlockSpec((c, t_block), lambda i, g: (0, i)),
                pl.BlockSpec((1, t_block + 8, t_block),
                             lambda i, g: (g[i], 0, 0)),
                pl.BlockSpec((1, f2, pvc), lambda i, g: (g[i], 0, 0)),
            ],
            out_specs=pl.BlockSpec((c, t_block), lambda i, g: (0, i)),
        ),
        compiler_params=pltpu.CompilerParams(
            dimension_semantics=("parallel",)),
    )(gid, x_all, wsp_stack, pv_stack)


# ---------------- parameter packing (hoisted out of the forward) -------------

def _pack_vecs(p):
    """Pack the tiny per-row params into one (2*d_ffn, 4) array."""
    c = p["g1"].shape[-1]
    f2 = p["b1"].shape[-1]
    f = f2 // 2
    assert f2 >= 2 * c, "packing assumes 2*d_ffn >= 2*d_model"
    col0 = p["b1"].reshape(f2, 1)
    col1 = jnp.concatenate([p["g1"].reshape(c, 1), p["be1"].reshape(c, 1),
                            jnp.zeros((f2 - 2 * c, 1), jnp.float32)], axis=0)
    col2 = jnp.concatenate([p["g2"].reshape(f, 1), p["be2"].reshape(f, 1)], axis=0)
    col3 = jnp.concatenate([p["b2"].reshape(c, 1),
                            jnp.zeros((f2 - c, 1), jnp.float32)], axis=0)
    return jnp.concatenate([col0, col1, col2, col3], axis=1)


def _pack_group(p, t_block):
    s = p["wsp"].shape[0]
    assert t_block % s == 0, "t_block must be a multiple of every window size"
    nb = t_block // s
    wspbd = jnp.kron(jnp.eye(nb, dtype=jnp.float32), p["wsp"].T)   # (T, T)
    bsp_row = jnp.tile(p["bsp"].reshape(1, s), (1, nb))            # (1, T)
    wsp_aug = jnp.concatenate(
        [wspbd, bsp_row, jnp.zeros((7, t_block), jnp.float32)], axis=0)

    c = p["w1"].shape[0]
    f2 = p["w1"].shape[1]
    f = f2 // 2
    w1t = p["w1"].T                                                # (2F, C)
    w2t = p["w2"].T                                                # (C, F)
    w2t_pad = jnp.concatenate(
        [w2t, jnp.zeros((f2 - c, f), jnp.float32)], axis=0)        # (2F, F)
    pv = jnp.concatenate([w1t, w2t_pad, _pack_vecs(p)], axis=1)    # (2F, C+F+4)
    return wsp_aug, pv


def pack_swmlp_params(params, t_block=128):
    """Precompute the stacked per-group kernel operands ONCE per param set."""
    groups = (params["mlp"], params["mlp_half"], params["mlp_quat"])
    packed = [_pack_group(p, t_block) for p in groups]
    wsp_stack = jnp.stack([w for w, _ in packed])    # (3, T+8, T)
    pv_stack = jnp.stack([v for _, v in packed])     # (3, 2F, C+F+4)
    return wsp_stack, pv_stack


# --------------------------- parameter construction --------------------------

def make_gmlp_params(key, d_model, seq_len):
    d_ffn = d_model * 2
    k1, k2, k3 = jax.random.split(key, 3)
    return {
        "g1": jnp.ones((1, d_model), jnp.float32),
        "be1": jnp.zeros((1, d_model), jnp.float32),
        "w1": 0.02 * jax.random.normal(k1, (d_model, 2 * d_ffn), jnp.float32),
        "b1": jnp.zeros((1, 2 * d_ffn), jnp.float32),
        "g2": jnp.ones((1, d_ffn), jnp.float32),
        "be2": jnp.zeros((1, d_ffn), jnp.float32),
        "wsp": 0.02 * jax.random.normal(k2, (seq_len, seq_len), jnp.float32),
        "bsp": jnp.ones((seq_len, 1), jnp.float32),   # gMLP init: spatial bias = 1
        "w2": 0.02 * jax.random.normal(k3, (d_ffn, d_model), jnp.float32),
        "b2": jnp.zeros((1, d_model), jnp.float32),
    }


# ------------------------------ shared glue -----------------------------------

def _cyclic_shift(x, ws):
    hw = ws // 2
    top = x[:, :, 0:hw, hw:]
    left = x[:, :, hw:, 0:hw]
    left_top = x[:, :, :hw, :hw]
    xs = jnp.concatenate([x[:, :, hw:, hw:], top], axis=2)
    xs = jnp.concatenate([xs, jnp.concatenate([left, left_top], axis=2)], axis=3)
    return xs


# --------------------------- Pallas SWMLP forward -----------------------------

def swmlp_forward_pallas(x, wsp_stack, pv_stack, *, w_size, t_block=128):
    b, c, h, w = x.shape
    ws = w_size
    hw = ws // 2
    nh, nw = h // ws, w // ws
    assert wsp_stack.shape[1] == t_block + 8 and wsp_stack.shape[2] == t_block

    xs = _cyclic_shift(x, ws)

    # Window partition directly in channel-first form: (c, b, nh, nw, ws, ws).
    # Token order inside a window is (row, col); window flattening per group
    # matches the reference (b, i, j) / (b, i) / (b, j) / (b) orderings.
    xcf = jnp.transpose(xs.reshape(b, c, nh, ws, nw, ws), (1, 0, 2, 4, 3, 5))

    # Per-group channel-first token slabs, tokens on the lane axis.
    g0 = xcf[:, :, :nh - 1, :nw - 1].reshape(c, -1)
    l_ = xcf[:, :, :nh - 1, nw - 1:, :, :hw].reshape(c, -1)
    r_ = xcf[:, :, :nh - 1, nw - 1:, :, hw:].reshape(c, -1)
    u_ = xcf[:, :, nh - 1:, :nw - 1, :hw, :].reshape(c, -1)
    d_ = xcf[:, :, nh - 1:, :nw - 1, hw:, :].reshape(c, -1)
    g1 = jnp.concatenate([l_, r_, u_, d_], axis=1)
    qa = xcf[:, :, nh - 1:, nw - 1:, :hw, :hw].reshape(c, -1)
    qb = xcf[:, :, nh - 1:, nw - 1:, :hw, hw:].reshape(c, -1)
    qc = xcf[:, :, nh - 1:, nw - 1:, hw:, :hw].reshape(c, -1)
    qd = xcf[:, :, nh - 1:, nw - 1:, hw:, hw:].reshape(c, -1)
    g2 = jnp.concatenate([qa, qb, qc, qd], axis=1)

    groups = [g0, g1, g2]
    tok = [int(gi.shape[1]) for gi in groups]             # real tokens per group
    blk = [-(-ti // t_block) for ti in tok]                # blocks per group
    pad = [bi * t_block - ti for bi, ti in zip(blk, tok)]
    slabs = [jnp.pad(gi, ((0, 0), (0, pi))) if pi else gi
             for gi, pi in zip(groups, pad)]
    x_all = jnp.concatenate(slabs, axis=1)                 # (c, sum(blk)*t_block)
    gid = jnp.asarray(np.repeat(np.arange(3, dtype=np.int32), blk))

    out_all = fused_gmlp(x_all, gid, wsp_stack, pv_stack, t_block)

    # Slice real tokens back per group (padded tail columns are discarded).
    offp = np.concatenate([[0], np.cumsum(np.asarray(blk) * t_block)])
    o0 = out_all[:, int(offp[0]):int(offp[0]) + tok[0]]
    o1 = out_all[:, int(offp[1]):int(offp[1]) + tok[1]]
    o2 = out_all[:, int(offp[2]):int(offp[2]) + tok[2]]

    # ---- channel-first reassembly (mirror of the reference permute/view chain)
    body = jnp.transpose(o0.reshape(c, b, nh - 1, nw - 1, ws, ws),
                         (1, 0, 2, 4, 3, 5)).reshape(b, c, h - ws, w - ws)

    tl = b * (nh - 1) * ws * hw
    tu = b * (nw - 1) * hw * ws

    def lr_piece(t2):
        return jnp.transpose(t2.reshape(c, b, nh - 1, ws, hw),
                             (1, 0, 2, 3, 4)).reshape(b, c, h - ws, hw)

    def ud_piece(t2):
        return jnp.transpose(t2.reshape(c, b, nw - 1, hw, ws),
                             (1, 0, 3, 2, 4)).reshape(b, c, hw, w - ws)

    l_o = lr_piece(o1[:, 0:tl])
    r_o = lr_piece(o1[:, tl:2 * tl])
    u_o = ud_piece(o1[:, 2 * tl:2 * tl + tu])
    d_o = ud_piece(o1[:, 2 * tl + tu:])

    tq = b * hw * hw

    def q_piece(t2):
        return jnp.transpose(t2.reshape(c, b, hw, hw), (1, 0, 2, 3))

    q1 = q_piece(o2[:, 0:tq])
    q2 = q_piece(o2[:, tq:2 * tq])
    q3 = q_piece(o2[:, 2 * tq:3 * tq])
    q4 = q_piece(o2[:, 3 * tq:])

    out = jnp.concatenate([jnp.concatenate([body, l_o], axis=3),
                           jnp.concatenate([u_o, q1], axis=3)], axis=2)
    out = jnp.concatenate([jnp.concatenate([r_o, q2], axis=2), out], axis=3)
    out = jnp.concatenate(
        [jnp.concatenate([q4, jnp.concatenate([d_o, q3], axis=3)], axis=3), out],
        axis=2)
    return out


# --------------------------- pure-JAX reference ------------------------------

def gmlp_ref(x, p):
    resid = x
    xn = _ln_lanes(x, p["g1"], p["be1"])
    h = _gelu(xn @ p["w1"] + p["b1"])
    f = p["w1"].shape[1] // 2
    u, v = h[..., :f], h[..., f:]
    vn = _ln_lanes(v, p["g2"], p["be2"])
    v2 = jnp.einsum("ij,njf->nif", p["wsp"], vn) + p["bsp"][None]
    return (u * v2) @ p["w2"] + p["b2"] + resid


def swmlp_forward_ref(x, params, w_size):
    """Verbatim C-last translation of the PyTorch forward, using gmlp_ref."""
    b, c, h, w = x.shape
    ws = w_size
    hw = ws // 2
    nh, nw = h // ws, w // ws

    xs = _cyclic_shift(x, ws)

    xs = xs.reshape(b, c, h, nw, ws)
    xs = jnp.transpose(xs, (0, 1, 3, 2, 4))
    xs = xs.reshape(b, c, nw, nh, ws, ws)
    xs = jnp.transpose(xs, (0, 1, 3, 2, 4, 5))
    xs = jnp.transpose(xs, (0, 2, 3, 4, 5, 1))

    completed = xs[:, :nh - 1, :nw - 1]
    first_inp = completed.reshape(-1, ws * ws, c)

    lr = xs[:, :nh - 1, nw - 1:]
    ud = xs[:, nh - 1:, :nw - 1]
    l_ = lr[:, :, :, :, :hw, :]
    r_ = lr[:, :, :, :, hw:, :]
    u_ = ud[:, :, :, :hw, :, :]
    d_ = ud[:, :, :, hw:, :, :]
    second_inp = jnp.concatenate([
        l_.reshape(-1, ws * ws // 2, c), r_.reshape(-1, ws * ws // 2, c),
        u_.reshape(-1, ws * ws // 2, c), d_.reshape(-1, ws * ws // 2, c)], axis=0)

    quat = xs[:, nh - 1:, nw - 1:]
    third_inp = jnp.concatenate([
        quat[:, :, :, :hw, :hw, :].reshape(-1, ws * ws // 4, c),
        quat[:, :, :, :hw, hw:, :].reshape(-1, ws * ws // 4, c),
        quat[:, :, :, hw:, :hw, :].reshape(-1, ws * ws // 4, c),
        quat[:, :, :, hw:, hw:, :].reshape(-1, ws * ws // 4, c)], axis=0)

    first_out = gmlp_ref(first_inp, params["mlp"])
    second_out = gmlp_ref(second_inp, params["mlp_half"])
    third_out = gmlp_ref(third_inp, params["mlp_quat"])

    body = first_out.reshape(b, nh - 1, nw - 1, ws, ws, c)
    body = jnp.transpose(body, (0, 5, 2, 1, 3, 4)).reshape(b, c, nw - 1, h - ws, ws)
    body = jnp.transpose(body, (0, 1, 3, 2, 4)).reshape(b, c, h - ws, w - ws)

    l_num = b * (nh - 1)

    def reshape_lr(t):
        t = t.reshape(b, nh - 1, 1, ws, hw, c)
        t = jnp.transpose(t, (0, 5, 2, 1, 3, 4)).reshape(b, c, 1, h - ws, hw)
        return jnp.transpose(t, (0, 1, 3, 2, 4)).reshape(b, c, h - ws, hw)

    def reshape_ud(t):
        t = t.reshape(b, 1, nw - 1, hw, ws, c)
        t = jnp.transpose(t, (0, 5, 2, 1, 3, 4)).reshape(b, c, nw - 1, hw, ws)
        return jnp.transpose(t, (0, 1, 3, 2, 4)).reshape(b, c, hw, w - ws)

    l_o = reshape_lr(second_out[:l_num])
    r_o = reshape_lr(second_out[l_num:2 * l_num])
    u_o = reshape_ud(second_out[2 * l_num:3 * l_num])
    d_o = reshape_ud(second_out[3 * l_num:])

    def reshape_quat(t):
        t = t.reshape(b, 1, 1, hw, hw, c)
        t = jnp.transpose(t, (0, 5, 2, 1, 3, 4)).reshape(b, c, 1, hw, hw)
        return jnp.transpose(t, (0, 1, 3, 2, 4)).reshape(b, c, hw, hw)

    q1 = reshape_quat(third_out[:b])
    q2 = reshape_quat(third_out[b:2 * b])
    q3 = reshape_quat(third_out[2 * b:3 * b])
    q4 = reshape_quat(third_out[3 * b:])

    out = jnp.concatenate([jnp.concatenate([body, l_o], axis=3),
                           jnp.concatenate([u_o, q1], axis=3)], axis=2)
    out = jnp.concatenate([jnp.concatenate([r_o, q2], axis=2), out], axis=3)
    out = jnp.concatenate(
        [jnp.concatenate([q4, jnp.concatenate([d_o, q3], axis=3)], axis=3), out],
        axis=2)
    return out


# ----------------------------------- main ------------------------------------

if __name__ == "__main__":
    d_model = 4
    w_size = 8
    b, c, h, w = 2, d_model, 2 * w_size, 2 * w_size   # x: [2, 4, 16, 16]
    seq_len = w_size * w_size

    root = jax.random.PRNGKey(0)
    kx, k1, k2, k3 = jax.random.split(root, 4)
    x = jax.random.normal(kx, (b, c, h, w), jnp.float32)

    params = {
        "mlp": make_gmlp_params(k1, d_model, seq_len),
        "mlp_half": make_gmlp_params(k2, d_model, seq_len // 2),
        "mlp_quat": make_gmlp_params(k3, d_model, seq_len // 4),
    }

    # Per-generation knob: multiple of 128 (v5e MXU tile); prefer 256 on
    # v6e/v7x once per-group token counts are large; keep 4*t_block^2 bytes of
    # the SGU operand comfortably inside scoped VMEM (t_block <= ~1K on v7x).
    t_block = 128

    # Hoisted weight preprocessing: done ONCE per parameter set, outside the
    # jitted forward path (kron block-diagonal, transposes, vector packing).
    wsp_stack, pv_stack = pack_swmlp_params(params, t_block)
    wsp_stack, pv_stack = jax.block_until_ready((wsp_stack, pv_stack))

    fwd = jax.jit(functools.partial(swmlp_forward_pallas, w_size=w_size,
                                    t_block=t_block))
    out = jax.block_until_ready(fwd(x, wsp_stack, pv_stack))

    # sanity check against an independent pure-JAX (C-last) reference path
    ref = swmlp_forward_ref(x, params, w_size)
    assert out.shape == (b, c, h, w)
    assert bool(jnp.all(jnp.isfinite(out)))
    assert bool(jnp.allclose(out, ref, atol=1e-4, rtol=1e-4))

    print("KERNEL_OK")
</pallas_src>

<mosaic_0001>
module attributes {stable_mosaic.version = 11 : i64} {
  func.func @fused_gmlp_kernel(%arg0: i32, %arg1: memref<4xi32, #tpu.memory_space<smem>>, %arg2: memref<4x128xf32, #tpu.memory_space<vmem>>, %arg3: memref<1x136x128xf32, #tpu.memory_space<vmem>>, %arg4: memref<1x16x16xf32, #tpu.memory_space<vmem>>, %arg5: memref<4x128xf32, #tpu.memory_space<vmem>>) attributes {dimension_semantics = [#tpu.dimension_semantics<parallel>], iteration_bounds = array<i64: 4>, scalar_prefetch = 1 : i64, scratch_operands = 0 : i64, tpu.core_type = #tpu.core_type<tc>, window_params = [{transform_indices = @transform_0, window_bounds = array<i64: 4, 128>}, {transform_indices = @transform_1, window_bounds = array<i64: 1, 136, 128>}, {transform_indices = @transform_2, window_bounds = array<i64: 1, 16, 16>}, {transform_indices = @transform_3, window_bounds = array<i64: 4, 128>}]} {
    %c0 = arith.constant 0 : index
    %c0_0 = arith.constant 0 : index
    %0 = vector.load %arg2[%c0, %c0_0] : memref<4x128xf32, #tpu.memory_space<vmem>>, vector<4x128xf32>
    %c0_1 = arith.constant 0 : index
    %c0_2 = arith.constant 0 : index
    %c0_3 = arith.constant 0 : index
    %1 = vector.load %arg4[%c0_1, %c0_2, %c0_3] : memref<1x16x16xf32, #tpu.memory_space<vmem>>, vector<1x16x16xf32>
    %2 = vector.shape_cast %1 : vector<1x16x16xf32> to vector<16x16xf32>
    %3 = vector.extract_strided_slice %2 {offsets = [0, 0], sizes = [16, 4], strides = [1, 1]} : vector<16x16xf32> to vector<16x4xf32>
    %4 = vector.extract_strided_slice %2 {offsets = [0, 4], sizes = [4, 8], strides = [1, 1]} : vector<16x16xf32> to vector<4x8xf32>
    %5 = vector.extract_strided_slice %2 {offsets = [0, 12], sizes = [16, 4], strides = [1, 1]} : vector<16x16xf32> to vector<16x4xf32>
    %6 = vector.extract_strided_slice %5 {offsets = [0, 0], sizes = [16, 1], strides = [1, 1]} : vector<16x4xf32> to vector<16x1xf32>
    %7 = vector.extract_strided_slice %5 {offsets = [0, 1], sizes = [4, 1], strides = [1, 1]} : vector<16x4xf32> to vector<4x1xf32>
    %8 = vector.extract_strided_slice %5 {offsets = [4, 1], sizes = [4, 1], strides = [1, 1]} : vector<16x4xf32> to vector<4x1xf32>
    %9 = vector.extract_strided_slice %5 {offsets = [0, 2], sizes = [8, 1], strides = [1, 1]} : vector<16x4xf32> to vector<8x1xf32>
    %10 = vector.extract_strided_slice %5 {offsets = [8, 2], sizes = [8, 1], strides = [1, 1]} : vector<16x4xf32> to vector<8x1xf32>
    %11 = vector.extract_strided_slice %5 {offsets = [0, 3], sizes = [4, 1], strides = [1, 1]} : vector<16x4xf32> to vector<4x1xf32>
    %c0_4 = arith.constant 0 : index
    %c0_5 = arith.constant 0 : index
    %c0_6 = arith.constant 0 : index
    %12 = vector.load %arg3[%c0_4, %c0_5, %c0_6] : memref<1x136x128xf32, #tpu.memory_space<vmem>>, vector<1x136x128xf32>
    %13 = vector.shape_cast %12 : vector<1x136x128xf32> to vector<136x128xf32>
    %14 = vector.extract_strided_slice %13 {offsets = [0, 0], sizes = [128, 128], strides = [1, 1]} : vector<136x128xf32> to vector<128x128xf32>
    %15 = vector.extract_strided_slice %13 {offsets = [128, 0], sizes = [1, 128], strides = [1, 1]} : vector<136x128xf32> to vector<1x128xf32>
    %cst = arith.constant dense<0.000000e+00> : vector<128xf32>
    %16 = vector.multi_reduction <add>, %0, %cst [0] : vector<4x128xf32> to vector<128xf32>
    %17 = vector.shape_cast %16 : vector<128xf32> to vector<1x128xf32>
    %cst_7 = arith.constant 4.000000e+00 : f32
    %18 = vector.broadcast %cst_7 : f32 to vector<1x128xf32>
    %19 = arith.divf %17, %18 : vector<1x128xf32>
    %20 = vector.broadcast %19 : vector<1x128xf32> to vector<4x128xf32>
    %21 = arith.subf %0, %20 : vector<4x128xf32>
    %22 = arith.mulf %21, %21 : vector<4x128xf32>
    %cst_8 = arith.constant dense<0.000000e+00> : vector<128xf32>
    %23 = vector.multi_reduction <add>, %22, %cst_8 [0] : vector<4x128xf32> to vector<128xf32>
    %24 = vector.shape_cast %23 : vector<128xf32> to vector<1x128xf32>
    %cst_9 = arith.constant 4.000000e+00 : f32
    %25 = vector.broadcast %cst_9 : f32 to vector<1x128xf32>
    %26 = arith.divf %24, %25 : vector<1x128xf32>
    %27 = vector.broadcast %19 : vector<1x128xf32> to vector<4x128xf32>
    %28 = arith.subf %0, %27 : vector<4x128xf32>
    %cst_10 = arith.constant 9.99999974E-6 : f32
    %29 = vector.broadcast %cst_10 : f32 to vector<1x128xf32>
    %30 = arith.addf %26, %29 : vector<1x128xf32>
    %31 = math.rsqrt %30 : vector<1x128xf32>
    %32 = vector.broadcast %31 : vector<1x128xf32> to vector<4x128xf32>
    %33 = arith.mulf %28, %32 : vector<4x128xf32>
    %34 = vector.broadcast %7 : vector<4x1xf32> to vector<4x128xf32>
    %35 = arith.mulf %33, %34 : vector<4x128xf32>
    %36 = vector.broadcast %8 : vector<4x1xf32> to vector<4x128xf32>
    %37 = arith.addf %35, %36 : vector<4x128xf32>
    %cst_11 = arith.constant dense<0.000000e+00> : vector<16x128xf32>
    %38 = tpu.matmul %3, %37, %cst_11 {dimension_numbers = #tpu.dot_dimension_numbers<[1], [0], [0], [1], [0, 0, 1, 1], [], []>} : vector<16x4xf32>, vector<4x128xf32>, vector<16x128xf32> -> vector<16x128xf32>
    %39 = vector.broadcast %6 : vector<16x1xf32> to vector<16x128xf32>
    %40 = arith.addf %38, %39 : vector<16x128xf32>
    %cst_12 = arith.constant 5.000000e-01 : f32
    %41 = vector.broadcast %cst_12 : f32 to vector<16x128xf32>
    %42 = arith.mulf %41, %40 : vector<16x128xf32>
    %cst_13 = arith.constant 0.707106769 : f32
    %43 = vector.broadcast %cst_13 : f32 to vector<16x128xf32>
    %44 = arith.mulf %40, %43 : vector<16x128xf32>
    %cst_14 = arith.constant 0.000000e+00 : f32
    %45 = vector.broadcast %cst_14 : f32 to vector<16x128xf32>
    %46 = arith.cmpf oge, %44, %45 : vector<16x128xf32>
    %cst_15 = arith.constant 1.000000e+00 : f32
    %cst_16 = arith.constant -1.000000e+00 : f32
    %47 = vector.broadcast %cst_15 : f32 to vector<16x128xf32>
    %48 = vector.broadcast %cst_16 : f32 to vector<16x128xf32>
    %49 = arith.select %46, %47, %48 : vector<16x128xi1>, vector<16x128xf32>
    %50 = math.absf %44 : vector<16x128xf32>
    %cst_17 = arith.constant 0.327591091 : f32
    %51 = vector.broadcast %cst_17 : f32 to vector<16x128xf32>
    %52 = arith.mulf %51, %50 : vector<16x128xf32>
    %cst_18 = arith.constant 1.000000e+00 : f32
    %53 = vector.broadcast %cst_18 : f32 to vector<16x128xf32>
    %54 = arith.addf %53, %52 : vector<16x128xf32>
    %cst_19 = arith.constant 1.000000e+00 : f32
    %55 = vector.broadcast %cst_19 : f32 to vector<16x128xf32>
    %56 = arith.divf %55, %54 : vector<16x128xf32>
    %cst_20 = arith.constant 1.06140542 : f32
    %57 = vector.broadcast %cst_20 : f32 to vector<16x128xf32>
    %58 = arith.mulf %57, %56 : vector<16x128xf32>
    %cst_21 = arith.constant -1.45315206 : f32
    %59 = vector.broadcast %cst_21 : f32 to vector<16x128xf32>
    %60 = arith.addf %58, %59 : vector<16x128xf32>
    %61 = arith.mulf %60, %56 : vector<16x128xf32>
    %cst_22 = arith.constant 1.42141378 : f32
    %62 = vector.broadcast %cst_22 : f32 to vector<16x128xf32>
    %63 = arith.addf %61, %62 : vector<16x128xf32>
    %64 = arith.mulf %63, %56 : vector<16x128xf32>
    %cst_23 = arith.constant -0.284496725 : f32
    %65 = vector.broadcast %cst_23 : f32 to vector<16x128xf32>
    %66 = arith.addf %64, %65 : vector<16x128xf32>
    %67 = arith.mulf %66, %56 : vector<16x128xf32>
    %cst_24 = arith.constant 0.254829586 : f32
    %68 = vector.broadcast %cst_24 : f32 to vector<16x128xf32>
    %69 = arith.addf %67, %68 : vector<16x128xf32>
    %70 = arith.mulf %69, %56 : vector<16x128xf32>
    %cst_25 = arith.constant 0.000000e+00 : f32
    %71 = vector.broadcast %cst_25 : f32 to vector<16x128xf32>
    %72 = arith.subf %71, %50 : vector<16x128xf32>
    %73 = arith.mulf %72, %50 : vector<16x128xf32>
    %74 = math.exp %73 : vector<16x128xf32>
    %75 = arith.mulf %70, %74 : vector<16x128xf32>
    %cst_26 = arith.constant 1.000000e+00 : f32
    %76 = vector.broadcast %cst_26 : f32 to vector<16x128xf32>
    %77 = arith.subf %76, %75 : vector<16x128xf32>
    %78 = arith.mulf %49, %77 : vector<16x128xf32>
    %cst_27 = arith.constant 1.000000e+00 : f32
    %79 = vector.broadcast %cst_27 : f32 to vector<16x128xf32>
    %80 = arith.addf %79, %78 : vector<16x128xf32>
    %81 = arith.mulf %42, %80 : vector<16x128xf32>
    %82 = vector.extract_strided_slice %81 {offsets = [0, 0], sizes = [8, 128], strides = [1, 1]} : vector<16x128xf32> to vector<8x128xf32>
    %83 = vector.extract_strided_slice %81 {offsets = [8, 0], sizes = [8, 128], strides = [1, 1]} : vector<16x128xf32> to vector<8x128xf32>
    %cst_28 = arith.constant dense<0.000000e+00> : vector<128xf32>
    %84 = vector.multi_reduction <add>, %83, %cst_28 [0] : vector<8x128xf32> to vector<128xf32>
    %85 = vector.shape_cast %84 : vector<128xf32> to vector<1x128xf32>
    %cst_29 = arith.constant 8.000000e+00 : f32
    %86 = vector.broadcast %cst_29 : f32 to vector<1x128xf32>
    %87 = arith.divf %85, %86 : vector<1x128xf32>
    %88 = vector.broadcast %87 : vector<1x128xf32> to vector<8x128xf32>
    %89 = arith.subf %83, %88 : vector<8x128xf32>
    %90 = arith.mulf %89, %89 : vector<8x128xf32>
    %cst_30 = arith.constant dense<0.000000e+00> : vector<128xf32>
    %91 = vector.multi_reduction <add>, %90, %cst_30 [0] : vector<8x128xf32> to vector<128xf32>
    %92 = vector.shape_cast %91 : vector<128xf32> to vector<1x128xf32>
    %cst_31 = arith.constant 8.000000e+00 : f32
    %93 = vector.broadcast %cst_31 : f32 to vector<1x128xf32>
    %94 = arith.divf %92, %93 : vector<1x128xf32>
    %95 = vector.broadcast %87 : vector<1x128xf32> to vector<8x128xf32>
    %96 = arith.subf %83, %95 : vector<8x128xf32>
    %cst_32 = arith.constant 9.99999974E-6 : f32
    %97 = vector.broadcast %cst_32 : f32 to vector<1x128xf32>
    %98 = arith.addf %94, %97 : vector<1x128xf32>
    %99 = math.rsqrt %98 : vector<1x128xf32>
    %100 = vector.broadcast %99 : vector<1x128xf32> to vector<8x128xf32>
    %101 = arith.mulf %96, %100 : vector<8x128xf32>
    %102 = vector.broadcast %9 : vector<8x1xf32> to vector<8x128xf32>
    %103 = arith.mulf %101, %102 : vector<8x128xf32>
    %104 = vector.broadcast %10 : vector<8x1xf32> to vector<8x128xf32>
    %105 = arith.addf %103, %104 : vector<8x128xf32>
    %cst_33 = arith.constant dense<0.000000e+00> : vector<8x128xf32>
    %106 = tpu.matmul %105, %14, %cst_33 {dimension_numbers = #tpu.dot_dimension_numbers<[1], [0], [0], [1], [0, 0, 1, 1], [], []>} : vector<8x128xf32>, vector<128x128xf32>, vector<8x128xf32> -> vector<8x128xf32>
    %107 = vector.broadcast %15 : vector<1x128xf32> to vector<8x128xf32>
    %108 = arith.addf %106, %107 : vector<8x128xf32>
    %109 = arith.mulf %82, %108 : vector<8x128xf32>
    %cst_34 = arith.constant dense<0.000000e+00> : vector<4x128xf32>
    %110 = tpu.matmul %4, %109, %cst_34 {dimension_numbers = #tpu.dot_dimension_numbers<[1], [0], [0], [1], [0, 0, 1, 1], [], []>} : vector<4x8xf32>, vector<8x128xf32>, vector<4x128xf32> -> vector<4x128xf32>
    %111 = vector.broadcast %11 : vector<4x1xf32> to vector<4x128xf32>
    %112 = arith.addf %110, %111 : vector<4x128xf32>
    %113 = arith.addf %112, %0 : vector<4x128xf32>
    %c0_35 = arith.constant 0 : index
    %c0_36 = arith.constant 0 : index
    %114 = vector.load %arg5[%c0_35, %c0_36] : memref<4x128xf32, #tpu.memory_space<vmem>>, vector<4x128xf32>
    tpu.vector_store %arg5[%c0_35, %c0_36], %113 {strides = array<i32>} : memref<4x128xf32, #tpu.memory_space<vmem>>, vector<4x128xf32>,
    return
  }
  func.func @transform_0(%arg0: i32, %arg1: memref<4xi32, #tpu.memory_space<smem>>) -> (i32, i32) {
    %c0_i32 = arith.constant 0 : i32
    %c0_i32_0 = arith.constant 0 : i32
    return %c0_i32, %arg0 : i32, i32
  }
  func.func @transform_1(%arg0: i32, %arg1: memref<4xi32, #tpu.memory_space<smem>>) -> (i32, i32, i32) {
    %0 = arith.index_cast %arg0 : i32 to index
    %1 = memref.load %arg1[%0] : memref<4xi32, #tpu.memory_space<smem>>
    %c0_i32 = arith.constant 0 : i32
    %c0_i32_0 = arith.constant 0 : i32
    %c0_i32_1 = arith.constant 0 : i32
    return %1, %c0_i32, %c0_i32_0 : i32, i32, i32
  }
  func.func @transform_2(%arg0: i32, %arg1: memref<4xi32, #tpu.memory_space<smem>>) -> (i32, i32, i32) {
    %0 = arith.index_cast %arg0 : i32 to index
    %1 = memref.load %arg1[%0] : memref<4xi32, #tpu.memory_space<smem>>
    %c0_i32 = arith.constant 0 : i32
    %c0_i32_0 = arith.constant 0 : i32
    %c0_i32_1 = arith.constant 0 : i32
    return %1, %c0_i32, %c0_i32_0 : i32, i32, i32
  }
  func.func @transform_3(%arg0: i32, %arg1: memref<4xi32, #tpu.memory_space<smem>>) -> (i32, i32) {
    %c0_i32 = arith.constant 0 : i32
    %c0_i32_0 = arith.constant 0 : i32
    return %c0_i32, %arg0 : i32, i32
  }
}

</mosaic_0001>

<llo_original>
// kernel: swmlp_forward_pallas.1
$region0: #{swmlp_forward_pallas.1}
  #allocation0 [shape = 'u32[]', space=smem, size = 0x4, offset = 0x4, fixed_abs, tag = 'smem constant byte address 0x4 - core index']
  #allocation1 [shape = 'u32[144,128]{1,0:T(1,128)}', space=vmem, size = 0x12000, scoped, tag = 'internal scratch']
  #allocation2 [shape = 's32[1]{0}', space=sflag, size = 0x4, scoped, tag = 'scoped memory for swmlp_forward_pallas.1']
  #allocation3 [shape = 'u8[512]{0}', space=smem, size = 0x200, scoped, tag = 'prefetched SMEM operand 0']
  %s0 = inlined_call_operand.vmem [shape: s32[4], index: 0, kind: input, shape index: {}]
  %s1 = inlined_call_operand.vmem [shape: f32[4,512], index: 1, kind: input, shape index: {}]
  %s2 = inlined_call_operand.vmem [shape: f32[3,136,128], index: 2, kind: input, shape index: {}]
  %s3 = inlined_call_operand.vmem [shape: f32[3,16,16], index: 3, kind: input, shape index: {}]
  %s4 = inlined_call_operand.vmem [shape: f32[4,512], index: 4, kind: output, shape index: {}]
  %s5 = sld [smem:[#allocation0]]
  $region45: #{swmlp_forward_pallas.1} parent=0
    _
  %s7 = ssub.s32 1, %s5
  %s8 = scalar_select 0, %s7, %s5
  %s9 = sshll.u32 %s0, 4
  %s10 = int_to_ptr.vmem [resolvable:$true] %s9
  %12 = dma.vmem_to_smem %s10, 16, [#allocation3], [#allocation2]
  %13 = dma.done [#allocation2], 16
  %14 = sfence
  loop: start=0, step=1, limit=6
  $region2: #{swmlp_forward_pallas.1} parent=0 // loop_pre_header
    _
  $region3: #{swmlp_forward_pallas.1} parent=0 // loop_header
    %s16 = sphi 0, %s20
    %p17 = scmp.ge.s32.totalorder %s16, 6
    %s26 = sphi 0, %s28
    %s29 = sphi 0, %s26
    %s30 = sphi 0, %s29
    %s46 = sphi 0, %s30
    %s54 = sphi 0, %s56
    %s57 = sphi 0, %s54
    %s58 = sphi 0, %s57
    %s74 = sphi 0, %s58
    %s82 = sphi 0, %s84
    %s85 = sphi 0, %s82
    %s86 = sphi 0, %s85
    %s102 = sphi 0, %s86
    %s108 = sphi 0, %s110
    %s111 = sphi 0, %s108
    %s112 = sphi 0, %s111
    %s128 = sphi 0, %s112
  $region4: #{swmlp_forward_pallas.1} parent=0 // loop_header_branch
    %19 = sbr.rel (%p17) target = $region8
  $region5: #{swmlp_forward_pallas.1} parent=0 // loop_body
    %s21 = ssub.s32 %s16, 1
    %s22 = ssub.s32 %s16, 2
    %s23 = sadd.s32 %s16, 1
    %s24 = ssub.s32 %s16, %s23
    %p25 = scmp.eq.s32.totalorder %s24, 0
    %s27 = sadd.s32 %s26, 1
    %s28 = scalar_select %p25, %s26, %s27
    %p31 = pneg %p25
    %p32 = scmp.eq.s32.totalorder %s16, 3
    %p33 = por %p31, %p32
    %p34 = scmp.ne.s32.totalorder %s26, %s29
    %p35 = scmp.eq.s32.totalorder %s16, 0
    %p36 = por %p34, %p35
    %p37 = scmp.ne.s32.totalorder %s26, %s29
    %p38 = scmp.eq.s32.totalorder %s21, 3
    %p39 = por %p37, %p38
    %p40 = scmp.ne.s32.totalorder %s29, %s30
    %p41 = scmp.eq.s32.totalorder %s21, 0
    %p42 = por %p40, %p41
    %p43 = scmp.ne.s32.totalorder %s29, %s30
    %p44 = scmp.eq.s32.totalorder %s22, 3
    %p45 = por %p43, %p44
    %p47 = scmp.ne.s32.totalorder %s30, %s46
    %p48 = scmp.eq.s32.totalorder %s22, 0
    %p49 = por %p47, %p48
    %s50 = sld [smem:[#allocation3 + %s16]]
    %s51 = sld [smem:[#allocation3 + %s23]]
    %s52 = ssub.s32 %s50, %s51
    %p53 = scmp.eq.s32.totalorder %s52, 0
    %s55 = sadd.s32 %s54, 1
    %s56 = scalar_select %p53, %s54, %s55
    %p59 = pneg %p53
    %p60 = scmp.eq.s32.totalorder %s16, 3
    %p61 = por %p59, %p60
    %p62 = scmp.ne.s32.totalorder %s54, %s57
    %p63 = scmp.eq.s32.totalorder %s16, 0
    %p64 = por %p62, %p63
    %p65 = scmp.ne.s32.totalorder %s54, %s57
    %p66 = scmp.eq.s32.totalorder %s21, 3
    %p67 = por %p65, %p66
    %p68 = scmp.ne.s32.totalorder %s57, %s58
    %p69 = scmp.eq.s32.totalorder %s21, 0
    %p70 = por %p68, %p69
    %p71 = scmp.ne.s32.totalorder %s57, %s58
    %p72 = scmp.eq.s32.totalorder %s22, 3
    %p73 = por %p71, %p72
    %p75 = scmp.ne.s32.totalorder %s58, %s74
    %p76 = scmp.eq.s32.totalorder %s22, 0
    %p77 = por %p75, %p76
    %s78 = sld [smem:[#allocation3 + %s16]]
    %s79 = sld [smem:[#allocation3 + %s23]]
    %s80 = ssub.s32 %s78, %s79
    %p81 = scmp.eq.s32.totalorder %s80, 0
    %s83 = sadd.s32 %s82, 1
    %s84 = scalar_select %p81, %s82, %s83
    %p87 = pneg %p81
    %p88 = scmp.eq.s32.totalorder %s16, 3
    %p89 = por %p87, %p88
    %p90 = scmp.ne.s32.totalorder %s82, %s85
    %p91 = scmp.eq.s32.totalorder %s16, 0
    %p92 = por %p90, %p91
    %p93 = scmp.ne.s32.totalorder %s82, %s85
    %p94 = scmp.eq.s32.totalorder %s21, 3
    %p95 = por %p93, %p94
    %p96 = scmp.ne.s32.totalorder %s85, %s86
    %p97 = scmp.eq.s32.totalorder %s21, 0
    %p98 = por %p96, %p97
    %p99 = scmp.ne.s32.totalorder %s85, %s86
    %p100 = scmp.eq.s32.totalorder %s22, 3
    %p101 = por %p99, %p100
    %p103 = scmp.ne.s32.totalorder %s86, %s102
    %p104 = scmp.eq.s32.totalorder %s22, 0
    %p105 = por %p103, %p104
    %s106 = ssub.s32 %s16, %s23
    %p107 = scmp.eq.s32.totalorder %s106, 0
    %s109 = sadd.s32 %s108, 1
    %s110 = scalar_select %p107, %s108, %s109
    %p113 = pneg %p107
    %p114 = scmp.eq.s32.totalorder %s16, 3
    %p115 = por %p113, %p114
    %p116 = scmp.ne.s32.totalorder %s108, %s111
    %p117 = scmp.eq.s32.totalorder %s16, 0
    %p118 = por %p116, %p117
    %p119 = scmp.ne.s32.totalorder %s108, %s111
    %p120 = scmp.eq.s32.totalorder %s21, 3
    %p121 = por %p119, %p120
    %p122 = scmp.ne.s32.totalorder %s111, %s112
    %p123 = scmp.eq.s32.totalorder %s21, 0
    %p124 = por %p122, %p123
    %p125 = scmp.ne.s32.totalorder %s111, %s112
    %p126 = scmp.eq.s32.totalorder %s22, 3
    %p127 = por %p125, %p126
    %p129 = scmp.ne.s32.totalorder %s112, %s128
    %p130 = scmp.eq.s32.totalorder %s22, 0
    %p131 = por %p129, %p130
    %p132 = scmp.le.s32.totalorder 1, %s16
    %p133 = scmp.lt.s32.totalorder %s16, 5
    %p134 = pnand %p132, %p133
    %p135 = pneg %p134
    // Predicated region
    $region9: #{swmlp_forward_pallas.1} parent=5 // pred_check
      _
    $region10: #{swmlp_forward_pallas.1} parent=5 // pred_check_branch
      %137 = sbr.rel (%p134) target = $region12
    $region11: #{swmlp_forward_pallas.1} parent=5 // pred_region
      %s138 = ssub.s32 %s16, 1
    $region12: #{swmlp_forward_pallas.1} parent=5 // pred_fallthru
      _
    %p139 = scmp.lt.s32.totalorder %s16, 4
    // Predicated region
    $region13: #{swmlp_forward_pallas.1} parent=5 // pred_check
      %p140 = pneg %p139
    $region14: #{swmlp_forward_pallas.1} parent=5 // pred_check_branch
      %142 = sbr.rel (%p140) target = $region16
    $region15: #{swmlp_forward_pallas.1} parent=5 // pred_region
      // Predicated region
      $region17: #{swmlp_forward_pallas.1} parent=15 // pred_check
        %p143 = pneg %p36
      $region18: #{swmlp_forward_pallas.1} parent=15 // pred_check_branch
        %145 = sbr.rel (%p143) target = $region20
      $region19: #{swmlp_forward_pallas.1} parent=15 // pred_region
        %p146 = scmp.lt.s32.totalorder %s16, 3
        %s147 = scalar_select %p146, %s16, 3
        %s148 = smul.addr %s147, 4
        %s149 = scalar_lea.vmem %s1, %s148
      $region20: #{swmlp_forward_pallas.1} parent=15 // pred_fallthru
        _
      // Predicated region
      $region21: #{swmlp_forward_pallas.1} parent=15 // pred_check
        %p150 = pneg %p64
      $region22: #{swmlp_forward_pallas.1} parent=15 // pred_check_branch
        %152 = sbr.rel (%p150) target = $region24
      $region23: #{swmlp_forward_pallas.1} parent=15 // pred_region
        %s153 = sld [smem:[#allocation3 + %s16]]
        %p154 = scmp.lt.s32.totalorder %s153, 2
        %s155 = scalar_select %p154, %s153, 2
        %s156 = smul.addr %s155, 17
        %s157 = smul.addr %s156, 8
        %s158 = scalar_lea.vmem %s2, %s157
        %s159 = sld [smem:[#allocation3 + %s16]]
      $region24: #{swmlp_forward_pallas.1} parent=15 // pred_fallthru
        _
      // Predicated region
      $region25: #{swmlp_forward_pallas.1} parent=15 // pred_check
        %p160 = pneg %p92
      $region26: #{swmlp_forward_pallas.1} parent=15 // pred_check_branch
        %162 = sbr.rel (%p160) target = $region28
      $region27: #{swmlp_forward_pallas.1} parent=15 // pred_region
        %s163 = sld [smem:[#allocation3 + %s16]]
        %p164 = scmp.lt.s32.totalorder %s163, 2
        %s165 = scalar_select %p164, %s163, 2
        %s166 = smul.addr %s165, 2
        %s167 = smul.addr %s166, 8
        %s168 = scalar_lea.vmem %s3, %s167
        %s169 = sld [smem:[#allocation3 + %s16]]
      $region28: #{swmlp_forward_pallas.1} parent=15 // pred_fallthru
        _
    $region16: #{swmlp_forward_pallas.1} parent=5 // pred_fallthru
      _
    %p170 = scmp.le.s32.totalorder 1, %s16
    %p171 = scmp.lt.s32.totalorder %s16, 5
    %p172 = pnand %p170, %p171
    %p173 = pneg %p172
    // Predicated region
    $region29: #{swmlp_forward_pallas.1} parent=5 // pred_check
      _
    $region30: #{swmlp_forward_pallas.1} parent=5 // pred_check_branch
      %175 = sbr.rel (%p172) target = $region32
    $region31: #{swmlp_forward_pallas.1} parent=5 // pred_region
      %s176 = ssub.s32 %s16, 1
      %p177 = scmp.lt.s32.totalorder %s21, 3
      %s178 = scalar_select %p177, %s21, 3
      %s179 = smul.addr %s178, 4
      %s180 = scalar_lea.vmem %s1, %s179
      %p181 = pneg %p42
      %p182 = pneg %p39
      %s183 = sld [smem:[#allocation3 + %s21]]
      %p184 = scmp.lt.s32.totalorder %s183, 2
      %s185 = scalar_select %p184, %s183, 2
      %s186 = smul.addr %s185, 17
      %s187 = smul.addr %s186, 8
      %s188 = scalar_lea.vmem %s2, %s187
      %p189 = pneg %p70
      %p190 = pneg %p67
      %s191 = sld [smem:[#allocation3 + %s21]]
      %p192 = scmp.lt.s32.totalorder %s191, 2
      %s193 = scalar_select %p192, %s191, 2
      %s194 = smul.addr %s193, 2
      %s195 = smul.addr %s194, 8
      %s196 = scalar_lea.vmem %s3, %s195
      %p197 = pneg %p98
      %p198 = pneg %p95
      %p199 = pneg %p124
      %p200 = pneg %p121
      %p201 = scmp.lt.s32.totalorder %s21, 3
      %s202 = scalar_select %p201, %s21, 3
      %s203 = smul.addr %s202, 4
      %s204 = scalar_lea.vmem %s4, %s203
      %p205 = scmp.lt.s32.totalorder %s21, 3
      %s206 = scalar_select %p205, %s21, 3
      %s207 = smul.addr %s206, 4
      %s208 = scalar_lea.vmem %s1, %s207
      %s209 = sld [smem:[#allocation3 + %s21]]
      %p210 = scmp.lt.s32.totalorder %s209, 2
      %s211 = scalar_select %p210, %s209, 2
      %s212 = smul.addr %s211, 17
      %s213 = smul.addr %s212, 8
      %s214 = scalar_lea.vmem %s2, %s213
      %s215 = sld [smem:[#allocation3 + %s21]]
      %s216 = sld [smem:[#allocation3 + %s21]]
      %p217 = scmp.lt.s32.totalorder %s216, 2
      %s218 = scalar_select %p217, %s216, 2
      %s219 = smul.addr %s218, 2
      %s220 = smul.addr %s219, 8
      %s221 = scalar_lea.vmem %s3, %s220
      %s222 = sld [smem:[#allocation3 + %s21]]
      %p223 = scmp.lt.s32.totalorder %s21, 3
      %s224 = scalar_select %p223, %s21, 3
      %s225 = smul.addr %s224, 4
      %s226 = scalar_lea.vmem %s4, %s225
      %v227 = vld [vmem:[%s208] sm:$0xf]
      %v228 = vld [vmem:[%s221] sm:$0xff]
      %v229 = vld [vmem:[%s221 + $0x8] sm:$0xff]
      %v230 = vld [vmem:[%s214] sm:$0xff]
      %v231 = vld [vmem:[%s214 + $0x8] sm:$0xff]
      %v232 = vld [vmem:[%s214 + $0x10] sm:$0xff]
      %v233 = vld [vmem:[%s214 + $0x18] sm:$0xff]
      %v234 = vld [vmem:[%s214 + $0x20] sm:$0xff]
      %v235 = vld [vmem:[%s214 + $0x28] sm:$0xff]
      %v236 = vld [vmem:[%s214 + $0x30] sm:$0xff]
      %v237 = vld [vmem:[%s214 + $0x38] sm:$0xff]
      %v238 = vld [vmem:[%s214 + $0x40] sm:$0xff]
      %v239 = vld [vmem:[%s214 + $0x48] sm:$0xff]
      %v240 = vld [vmem:[%s214 + $0x50] sm:$0xff]
      %v241 = vld [vmem:[%s214 + $0x58] sm:$0xff]
      %v242 = vld [vmem:[%s214 + $0x60] sm:$0xff]
      %v243 = vld [vmem:[%s214 + $0x68] sm:$0xff]
      %v244 = vld [vmem:[%s214 + $0x70] sm:$0xff]
      %v245 = vld [vmem:[%s214 + $0x78] sm:$0xff]
      %v246 = vld [vmem:[%s214 + $0x80] sm:$0xff]
      %vm247 = vcmask 1043456
      %v248 = vsel %vm247, %v227, 0.0
      %v249 = vrot.slane %v248, 4
      %v250 = vadd.f32 %v248, %v249
      %v251 = vrot.slane %v250, 2
      %v252 = vadd.f32 %v250, %v251
      %v253 = vrot.slane %v252, 1
      %v254 = vadd.f32 %v252, %v253
      %v255 = vrcp.pop 4.0
      %v256 = vmul.f32 %v254, %v255
      %v257 = vsub.f32 %v227, %v256
      %v258 = vmul.f32 %v257, %v257
      %v259 = vsel %vm247, %v258, 0.0
      %v260 = vrot.slane %v259, 4
      %v261 = vadd.f32 %v259, %v260
      %v262 = vrot.slane %v261, 2
      %v263 = vadd.f32 %v261, %v262
      %v264 = vrot.slane %v263, 1
      %v265 = vadd.f32 %v263, %v264
      %v266 = vmul.f32 %v265, %v255
      %v267 = vadd.f32 %v266, 1e-05
      %v268 = vrsqrt.pop %v267
      %v269 = vmul.f32 %v257, %v268
      %271 = vset.pattern.permute.xlu0 13
      %272 = vperm.xlu0 %271, %v228
      %v273 = vpop.permute.xlu0 %272
      %v275 = vmul.f32 %v269, %v273
      %v276 = vrot.slane %v273, 4
      %v278 = vadd.f32 %v275, %v276
      %279 = vset.pattern.permute.xlu0 12
      %280 = vperm.xlu0 %279, %v228
      %v281 = vpop.permute.xlu0 %280
      %284 = vset.pattern.permute.xlu0 12
      %285 = vperm.xlu0 %284, %v229
      %v286 = vpop.permute.xlu0 %285
      %vm288 = vcmask 31744
      %v289 = vsel %vm288, %v228, 0
      %v291 = vsel %vm288, %v229, 0
      %v294 = vsel %vm247, %v278, 0
      %296 = vmatprep.subr.mxu0 0.0
      %297 = vmatpush1.msra.mxu0 %v294
      %298 = vmatprep.subr.mxu0 0.0
      %299 = vmatpush1.msra.mxu0 0.0
      %300 = vmatprep.subr.mxu0 0.0
      %301 = vmatpush1.msra.mxu0 0.0
      %302 = vmatprep.subr.mxu0 0.0
      %303 = vmatpush1.msra.mxu0 0.0
      %304 = vmatprep.subr.mxu0 0.0
      %305 = vmatpush1.msra.mxu0 0.0
      %306 = vmatprep.subr.mxu0 0.0
      %307 = vmatpush1.msra.mxu0 0.0
      %308 = vmatprep.subr.mxu0 0.0
      %309 = vmatpush1.msra.mxu0 0.0
      %310 = vmatprep.subr.mxu0 0.0
      %311 = vmatpush1.msra.mxu0 0.0
      %312 = vmatprep.subr.mxu0 0.0
      %313 = vmatpush1.msra.mxu0 0.0
      %314 = vmatprep.subr.mxu0 0.0
      %315 = vmatpush1.msra.mxu0 0.0
      %316 = vmatprep.subr.mxu0 0.0
      %317 = vmatpush1.msra.mxu0 0.0
      %318 = vmatprep.subr.mxu0 0.0
      %319 = vmatpush1.msra.mxu0 0.0
      %320 = vmatprep.subr.mxu0 0.0
      %321 = vmatpush1.msra.mxu0 0.0
      %322 = vmatprep.subr.mxu0 0.0
      %323 = vmatpush1.msra.mxu0 0.0
      %324 = vmatprep.subr.mxu0 0.0
      %325 = vmatpush1.msra.mxu0 0.0
      %326 = vmatprep.subr.mxu0 0.0
      %327 = vmatpush1.msra.mxu0 0.0
      %328 = vmatprep.subr.mxu0 0.0
      %329 = vmatpush1.msra.mxu0 0.0
      %330 = vmatprep.subr.mxu0 0.0
      %331 = vmatpush1.msra.mxu0 0.0
      %332 = vmatprep.subr.mxu0 0.0
      %333 = vmatpush1.msra.mxu0 0.0
      %334 = vmatprep.subr.mxu0 0.0
      %335 = vmatpush1.msra.mxu0 0.0
      %336 = vmatprep.subr.mxu0 0.0
      %337 = vmatpush1.msra.mxu0 0.0
      %338 = vmatprep.subr.mxu0 0.0
      %339 = vmatpush1.msra.mxu0 0.0
      %340 = vmatprep.subr.mxu0 0.0
      %341 = vmatpush1.msra.mxu0 0.0
      %342 = vmatprep.subr.mxu0 0.0
      %343 = vmatpush1.msra.mxu0 0.0
      %344 = vmatprep.subr.mxu0 0.0
      %345 = vmatpush1.msra.mxu0 0.0
      %346 = vmatprep.subr.mxu0 0.0
      %347 = vmatpush1.msra.mxu0 0.0
      %348 = vmatprep.subr.mxu0 0.0
      %349 = vmatpush1.msra.mxu0 0.0
      %350 = vmatprep.subr.mxu0 0.0
      %351 = vmatpush1.msra.mxu0 0.0
      %352 = vmatprep.subr.mxu0 0.0
      %353 = vmatpush1.msra.mxu0 0.0
      %354 = vmatprep.subr.mxu0 0.0
      %355 = vmatpush1.msra.mxu0 0.0
      %356 = vmatprep.subr.mxu0 0.0
      %357 = vmatpush1.msra.mxu0 0.0
      %358 = vmatprep.subr.mxu0 0.0
      %359 = vmatpush1.msra.mxu0 0.0
      %360 = vmatprep.mubr.f32.mxu0 0.0
      %361 = vmatmul.mubr.f32.gmra.mrb[0].mxu0 %v289
      %v362 = vpop.f32.mrb[0].mxu0
      %v363 = vadd.f32 %v281, %v362
      %v364 = vpop.f32.mrb[0].mxu0
      %365 = vmatprep.mubr.f32.mxu0 0.0
      %366 = vmatmul.mubr.f32.gmra.mrb[0].mxu0 %v291
      %v367 = vpop.f32.mrb[0].mxu0
      %v368 = vadd.f32 %v286, %v367
      %v369 = vpop.f32.mrb[0].mxu0
      %370 = vdwg.mxu0
      %v371 = vmul.f32 %v363, 0.5
      %v372 = vmul.f32 %v368, 0.5
      %v373 = vmul.f32 %v363, 0.70710677
      %v374 = vmul.f32 %v368, 0.70710677
      %vm375 = vcmp.ge.f32.partialorder %v373, 0.0
      %vm376 = vcmp.ge.f32.partialorder %v374, 0.0
      %v377 = vsel %vm375, 1.0, -1.0
      %v378 = vsel %vm376, 1.0, -1.0
      %v379 = vand.u32 2147483647, %v373
      %v380 = vand.u32 2147483647, %v374
      %v381 = vmul.f32 %v379, 0.3275911
      %v382 = vmul.f32 %v380, 0.3275911
      %v383 = vadd.f32 %v381, 1.0
      %v384 = vadd.f32 %v382, 1.0
      %v385 = vrcp.pop %v383
      %v386 = vmul.f32 1.0, %v385
      %v387 = vrcp.pop %v384
      %v388 = vmul.f32 1.0, %v387
      %v389 = vmul.f32 %v386, 1.0614054
      %v390 = vmul.f32 %v388, 1.0614054
      %v391 = vadd.f32 %v389, -1.4531521
      %v392 = vadd.f32 %v390, -1.4531521
      %v393 = vmul.f32 %v391, %v386
      %v394 = vmul.f32 %v392, %v388
      %v395 = vadd.f32 %v393, 1.4214138
      %v396 = vadd.f32 %v394, 1.4214138
      %v397 = vmul.f32 %v395, %v386
      %v398 = vmul.f32 %v396, %v388
      %v399 = vadd.f32 %v397, -0.28449672
      %v400 = vadd.f32 %v398, -0.28449672
      %v401 = vmul.f32 %v399, %v386
      %v402 = vmul.f32 %v400, %v388
      %v403 = vadd.f32 %v401, 0.2548296
      %v404 = vadd.f32 %v402, 0.2548296
      %v405 = vmul.f32 %v403, %v386
      %v406 = vmul.f32 %v404, %v388
      %v407 = vsub.f32 0.0, %v379
      %v408 = vsub.f32 0.0, %v380
      %v409 = vmul.f32 %v407, %v379
      %v410 = vmul.f32 %v408, %v380
      %v411 = vmul.f32 %v409, 1.442695
      %v412 = vpow.pop %v411
      %v413 = vmul.f32 %v410, 1.442695
      %v414 = vpow.pop %v413
      %v415 = vmul.f32 %v405, %v412
      %v416 = vmul.f32 %v406, %v414
      %v417 = vsub.f32 1.0, %v415
      %v418 = vsub.f32 1.0, %v416
      %v419 = vmul.f32 %v377, %v417
      %v420 = vmul.f32 %v378, %v418
      %v421 = vadd.f32 %v419, 1.0
      %v422 = vadd.f32 %v420, 1.0
      %v423 = vmul.f32 %v371, %v421
      %v424 = vmul.f32 %v372, %v422
      %v425 = vrot.slane %v424, 4
      %v426 = vadd.f32 %v424, %v425
      %v427 = vrot.slane %v426, 2
      %v428 = vadd.f32 %v426, %v427
      %v429 = vrot.slane %v428, 1
      %v430 = vadd.f32 %v428, %v429
      %v431 = vrcp.pop 8.0
      %v432 = vmul.f32 %v430, %v431
      %v433 = vsub.f32 %v424, %v432
      %v434 = vmul.f32 %v433, %v433
      %v435 = vrot.slane %v434, 4
      %v436 = vadd.f32 %v434, %v435
      %v437 = vrot.slane %v436, 2
      %v438 = vadd.f32 %v436, %v437
      %v439 = vrot.slane %v438, 1
      %v440 = vadd.f32 %v438, %v439
      %v441 = vmul.f32 %v440, %v431
      %v442 = vadd.f32 %v441, 1e-05
      %v443 = vrsqrt.pop %v442
      %v444 = vmul.f32 %v433, %v443
      %445 = vset.pattern.permute.xlu0 14
      %446 = vperm.xlu0 %445, %v228
      %v447 = vpop.permute.xlu0 %446
      %v449 = vmul.f32 %v444, %v447
      %450 = vset.pattern.permute.xlu0 14
      %451 = vperm.xlu0 %450, %v229
      %v452 = vpop.permute.xlu0 %451
      %v454 = vadd.f32 %v449, %v452
      %v455 = vlaneseq
      %v456 = vshrl.u32 %v455, 7
      %v457 = vsub.s32 0, %v456
      %v458 = vrot.slane %v246, %v457
      %459 = vmatprep.subr.mxu0 0.0
      %460 = vmatpush1.msra.mxu0 %v230
      %461 = vmatprep.subr.mxu0 0.0
      %462 = vmatpush1.msra.mxu0 %v231
      %463 = vmatprep.subr.mxu0 0.0
      %464 = vmatpush1.msra.mxu0 %v232
      %465 = vmatprep.subr.mxu0 0.0
      %466 = vmatpush1.msra.mxu0 %v233
      %467 = vmatprep.subr.mxu0 0.0
      %468 = vmatpush1.msra.mxu0 %v234
      %469 = vmatprep.subr.mxu0 0.0
      %470 = vmatpush1.msra.mxu0 %v235
      %471 = vmatprep.subr.mxu0 0.0
      %472 = vmatpush1.msra.mxu0 %v236
      %473 = vmatprep.subr.mxu0 0.0
      %474 = vmatpush1.msra.mxu0 %v237
      %475 = vmatprep.subr.mxu0 0.0
      %476 = vmatpush1.msra.mxu0 %v238
      %477 = vmatprep.subr.mxu0 0.0
      %478 = vmatpush1.msra.mxu0 %v239
      %479 = vmatprep.subr.mxu0 0.0
      %480 = vmatpush1.msra.mxu0 %v240
      %481 = vmatprep.subr.mxu0 0.0
      %482 = vmatpush1.msra.mxu0 %v241
      %483 = vmatprep.subr.mxu0 0.0
      %484 = vmatpush1.msra.mxu0 %v242
      %485 = vmatprep.subr.mxu0 0.0
      %486 = vmatpush1.msra.mxu0 %v243
      %487 = vmatprep.subr.mxu0 0.0
      %488 = vmatpush1.msra.mxu0 %v244
      %489 = vmatprep.subr.mxu0 0.0
      %490 = vmatpush1.msra.mxu0 %v245
      %491 = vmatprep.subr.mxu0 0.0
      %492 = vmatpush1.msra.mxu0 0.0
      %493 = vmatprep.subr.mxu0 0.0
      %494 = vmatpush1.msra.mxu0 0.0
      %495 = vmatprep.subr.mxu0 0.0
      %496 = vmatpush1.msra.mxu0 0.0
      %497 = vmatprep.subr.mxu0 0.0
      %498 = vmatpush1.msra.mxu0 0.0
      %499 = vmatprep.subr.mxu0 0.0
      %500 = vmatpush1.msra.mxu0 0.0
      %501 = vmatprep.subr.mxu0 0.0
      %502 = vmatpush1.msra.mxu0 0.0
      %503 = vmatprep.subr.mxu0 0.0
      %504 = vmatpush1.msra.mxu0 0.0
      %505 = vmatprep.subr.mxu0 0.0
      %506 = vmatpush1.msra.mxu0 0.0
      %507 = vmatprep.subr.mxu0 0.0
      %508 = vmatpush1.msra.mxu0 0.0
      %509 = vmatprep.subr.mxu0 0.0
      %510 = vmatpush1.msra.mxu0 0.0
      %511 = vmatprep.subr.mxu0 0.0
      %512 = vmatpush1.msra.mxu0 0.0
      %513 = vmatprep.subr.mxu0 0.0
      %514 = vmatpush1.msra.mxu0 0.0
      %515 = vmatprep.subr.mxu0 0.0
      %516 = vmatpush1.msra.mxu0 0.0
      %517 = vmatprep.subr.mxu0 0.0
      %518 = vmatpush1.msra.mxu0 0.0
      %519 = vmatprep.subr.mxu0 0.0
      %520 = vmatpush1.msra.mxu0 0.0
      %521 = vmatprep.subr.mxu0 0.0
      %522 = vmatpush1.msra.mxu0 0.0
      %523 = vmatprep.mubr.f32.mxu0 0.0
      %524 = vmatmul.mubr.f32.gmra.mrb[0].mxu0 %v454
      %v525 = vpop.f32.mrb[0].mxu0
      %v526 = vadd.f32 %v458, %v525
      %v527 = vpop.f32.mrb[0].mxu0
      %528 = vdwg.mxu0
      %v529 = vmul.f32 %v423, %v526
      %530 = vset.pattern.permute.xlu0 15
      %531 = vperm.xlu0 %530, %v228
      %v532 = vpop.permute.xlu0 %531
      %534 = vrot.lane.b32.xlu0 %v228, 124
      %v535 = vpop.permute.xlu0 %534
      %vm536 = vcmask 64512
      %v537 = vsel %vm536, %v535, 0
      %539 = vmatprep.subr.mxu0 0.0
      %540 = vmatpush1.msra.mxu0 %v529
      %541 = vmatprep.subr.mxu0 0.0
      %542 = vmatpush1.msra.mxu0 0.0
      %543 = vmatprep.subr.mxu0 0.0
      %544 = vmatpush1.msra.mxu0 0.0
      %545 = vmatprep.subr.mxu0 0.0
      %546 = vmatpush1.msra.mxu0 0.0
      %547 = vmatprep.subr.mxu0 0.0
      %548 = vmatpush1.msra.mxu0 0.0
      %549 = vmatprep.subr.mxu0 0.0
      %550 = vmatpush1.msra.mxu0 0.0
      %551 = vmatprep.subr.mxu0 0.0
      %552 = vmatpush1.msra.mxu0 0.0
      %553 = vmatprep.subr.mxu0 0.0
      %554 = vmatpush1.msra.mxu0 0.0
      %555 = vmatprep.subr.mxu0 0.0
      %556 = vmatpush1.msra.mxu0 0.0
      %557 = vmatprep.subr.mxu0 0.0
      %558 = vmatpush1.msra.mxu0 0.0
      %559 = vmatprep.subr.mxu0 0.0
      %560 = vmatpush1.msra.mxu0 0.0
      %561 = vmatprep.subr.mxu0 0.0
      %562 = vmatpush1.msra.mxu0 0.0
      %563 = vmatprep.subr.mxu0 0.0
      %564 = vmatpush1.msra.mxu0 0.0
      %565 = vmatprep.subr.mxu0 0.0
      %566 = vmatpush1.msra.mxu0 0.0
      %567 = vmatprep.subr.mxu0 0.0
      %568 = vmatpush1.msra.mxu0 0.0
      %569 = vmatprep.subr.mxu0 0.0
      %570 = vmatpush1.msra.mxu0 0.0
      %571 = vmatprep.subr.mxu0 0.0
      %572 = vmatpush1.msra.mxu0 0.0
      %573 = vmatprep.subr.mxu0 0.0
      %574 = vmatpush1.msra.mxu0 0.0
      %575 = vmatprep.subr.mxu0 0.0
      %576 = vmatpush1.msra.mxu0 0.0
      %577 = vmatprep.subr.mxu0 0.0
      %578 = vmatpush1.msra.mxu0 0.0
      %579 = vmatprep.subr.mxu0 0.0
      %580 = vmatpush1.msra.mxu0 0.0
      %581 = vmatprep.subr.mxu0 0.0
      %582 = vmatpush1.msra.mxu0 0.0
      %583 = vmatprep.subr.mxu0 0.0
      %584 = vmatpush1.msra.mxu0 0.0
      %585 = vmatprep.subr.mxu0 0.0
      %586 = vmatpush1.msra.mxu0 0.0
      %587 = vmatprep.subr.mxu0 0.0
      %588 = vmatpush1.msra.mxu0 0.0
      %589 = vmatprep.subr.mxu0 0.0
      %590 = vmatpush1.msra.mxu0 0.0
      %591 = vmatprep.subr.mxu0 0.0
      %592 = vmatpush1.msra.mxu0 0.0
      %593 = vmatprep.subr.mxu0 0.0
      %594 = vmatpush1.msra.mxu0 0.0
      %595 = vmatprep.subr.mxu0 0.0
      %596 = vmatpush1.msra.mxu0 0.0
      %597 = vmatprep.subr.mxu0 0.0
      %598 = vmatpush1.msra.mxu0 0.0
      %599 = vmatprep.subr.mxu0 0.0
      %600 = vmatpush1.msra.mxu0 0.0
      %601 = vmatprep.subr.mxu0 0.0
      %602 = vmatpush1.msra.mxu0 0.0
      %603 = vmatprep.mubr.f32.mxu0 0.0
      %604 = vmatmul.mubr.f32.gmra.mrb[0].mxu0 %v537
      %v605 = vpop.f32.mrb[0].mxu0
      %v606 = vadd.f32 %v532, %v605
      %v607 = vpop.f32.mrb[0].mxu0
      %608 = vdwg.mxu0
      %v609 = vadd.f32 %v606, %v227
      %610 = vst [vmem:[%s226] sm:$0xf] %v609
      %p611 = scmp.lt.s32.totalorder %s21, 3
      %s612 = scalar_select %p611, %s21, 3
      %s613 = smul.addr %s612, 4
      %s614 = scalar_lea.vmem %s4, %s613
      // Predicated region
      $region33: #{swmlp_forward_pallas.1} parent=31 // pred_check
        %p615 = pneg %p121
      $region34: #{swmlp_forward_pallas.1} parent=31 // pred_check_branch
        %617 = sbr.rel (%p615) target = $region36
      $region35: #{swmlp_forward_pallas.1} parent=31 // pred_region
        _
      $region36: #{swmlp_forward_pallas.1} parent=31 // pred_fallthru
        _
    $region32: #{swmlp_forward_pallas.1} parent=5 // pred_fallthru
      _
    %p618 = scmp.le.s32.totalorder 2, %s16
    // Predicated region
    $region37: #{swmlp_forward_pallas.1} parent=5 // pred_check
      %p619 = pneg %p618
    $region38: #{swmlp_forward_pallas.1} parent=5 // pred_check_branch
      %621 = sbr.rel (%p619) target = $region40
    $region39: #{swmlp_forward_pallas.1} parent=5 // pred_region
      %s622 = ssub.s32 %s16, 2
      // Predicated region
      $region41: #{swmlp_forward_pallas.1} parent=39 // pred_check
        %p623 = pneg %p127
      $region42: #{swmlp_forward_pallas.1} parent=39 // pred_check_branch
        %625 = sbr.rel (%p623) target = $region44
      $region43: #{swmlp_forward_pallas.1} parent=39 // pred_region
        %p626 = scmp.lt.s32.totalorder %s22, 3
        %s627 = scalar_select %p626, %s22, 3
        %s628 = smul.addr %s627, 4
        %s629 = scalar_lea.vmem %s4, %s628
      $region44: #{swmlp_forward_pallas.1} parent=39 // pred_fallthru
        _
    $region40: #{swmlp_forward_pallas.1} parent=5 // pred_fallthru
      _
  $region6: #{swmlp_forward_pallas.1} parent=0 // loop_footer
    %s20 = sadd.s32 1, %s16
  $region7: #{swmlp_forward_pallas.1} parent=0 // loop_footer_branch
    %15 = sbr.rel target = $region3
  $region8: #{swmlp_forward_pallas.1} parent=0 // loop_exit
    _

</llo_original>
